<compile_context>
chip_gen: v7x
topology: tpu7x:2x2x1
jax: 0.10.0
libtpu: 0.0.40
codegen_flags: <defaults>
</compile_context>

<pallas_src>
import jax
import jax.numpy as jnp
from jax.experimental import pallas as pl
from jax.experimental.pallas import tpu as pltpu

IN_FEATURES = 64
OUT_FEATURES = 64

# Below this many rows a single 64x64 GEMM is cheaper as a plain (fusable)
# XLA op than a standalone pallas_call.
FAST_PATH_ROWS = 512

# Target ~2 MiB per streamed VMEM tile (x and out each). Double-buffered this
# is ~8 MiB: inside v5e's 16 MiB scoped-VMEM default and v7x's 64 MiB VMEM.
TARGET_TILE_BYTES = 2 * 1024 * 1024


def _round_up(n, m):
    return ((n + m - 1) // m) * m


def _sublane_multiple(dtype):
    itemsize = jnp.dtype(dtype).itemsize
    if itemsize == 4:
        return 8
    if itemsize == 2:
        return 16
    return 32


def _hw_pack():
    # v6e / v7x MXUs are 256 lanes wide -> 4-way packing; v5e is 128 -> 2-way.
    try:
        kind = jax.devices()[0].device_kind.lower()
        if "v5" in kind:
            return 2
    except Exception:
        pass
    return 4


def linear_kernel(x_ref, w_ref, b_ref, o_ref):
    # x_ref: (TB, L) VMEM   w_ref: (L, L) VMEM (resident)   b_ref: (1, L) VMEM
    # o_ref: (TB, L) VMEM   with L = 64 * pack (lane-dense)
    acc = jnp.dot(x_ref[...], w_ref[...], preferred_element_type=jnp.float32)
    o_ref[...] = (acc + b_ref[...]).astype(o_ref.dtype)


def _packed_params(w, b, pack):
    # w: (out=64, in=64) torch layout -> wt = W^T so that y = x @ wt + b.
    wt = w.T
    if pack == 1:
        return wt, b.reshape(1, OUT_FEATURES)
    lanes = IN_FEATURES * pack
    wp = jnp.zeros((lanes, lanes), dtype=wt.dtype)
    for p in range(pack):
        s = p * IN_FEATURES
        wp = wp.at[s:s + IN_FEATURES, s:s + OUT_FEATURES].set(wt)
    bp = jnp.tile(b.reshape(1, OUT_FEATURES), (1, pack))
    return wp, bp


def net_forward(x, w, b):
    """y = x @ W^T + b.  x: [B, 64], w: [64, 64] (torch (out,in) layout), b: [64]."""
    batch = x.shape[0]

    # Tiny batches: let XLA fuse the 64x64 GEMV; pallas_call would be overhead.
    if batch <= FAST_PATH_ROWS:
        return x @ w.T + b

    # Pick the largest lane-packing factor that divides the batch.
    for pack in (_hw_pack(), 2, 1):
        if batch % pack == 0:
            break
    lanes = IN_FEATURES * pack
    rows = batch // pack
    xp = x.reshape(rows, lanes)          # contiguous view, no data movement
    wp, bp = _packed_params(w, b, pack)  # blockdiag(W^T,...), tiled bias

    sub = _sublane_multiple(x.dtype)
    itemsize = jnp.dtype(x.dtype).itemsize
    tb_max = max(sub, _round_up(TARGET_TILE_BYTES // (lanes * itemsize), sub))
    # Keep the grid >= 2 steps so v7x's two TensorCores both get work and the
    # streamed input/output actually double-buffers.
    tb = min(tb_max, _round_up(pl.cdiv(rows, 2), sub))
    grid = (pl.cdiv(rows, tb),)  # ragged last tile handled by Pallas

    cost = pl.CostEstimate(
        flops=2 * rows * lanes * lanes,
        transcendentals=0,
        bytes_accessed=(rows * lanes        # x
                        + lanes * lanes     # packed W
                        + lanes             # packed b
                        + rows * lanes      # out
                        ) * itemsize,
    )

    out = pl.pallas_call(
        linear_kernel,
        out_shape=jax.ShapeDtypeStruct((rows, lanes), x.dtype),
        grid_spec=pltpu.PrefetchScalarGridSpec(
            num_scalar_prefetch=0,
            grid=grid,
            in_specs=[
                # streamed batch tile of packed x
                pl.BlockSpec((tb, lanes), lambda i: (i, 0)),
                # packed weight + bias: constant index map -> VMEM-resident
                pl.BlockSpec((lanes, lanes), lambda i: (0, 0)),
                pl.BlockSpec((1, lanes), lambda i: (0, 0)),
            ],
            out_specs=pl.BlockSpec((tb, lanes), lambda i: (i, 0)),
        ),
        compiler_params=pltpu.CompilerParams(
            # Batch tiles are independent -> parallel (lets v7x use both TCs).
            dimension_semantics=("parallel",),
        ),
        cost_estimate=cost,
    )(xp, wp, bp)

    return out.reshape(batch, OUT_FEATURES)


if __name__ == "__main__":
    key = jax.random.PRNGKey(0)
    k_x, k_w, k_b = jax.random.split(key, 3)

    # Deterministic parameter init (mimics torch.nn.Linear uniform bound 1/sqrt(in)).
    bound = 1.0 / (IN_FEATURES ** 0.5)
    w = jax.random.uniform(k_w, (OUT_FEATURES, IN_FEATURES),
                           minval=-bound, maxval=bound, dtype=jnp.float32)
    b = jax.random.uniform(k_b, (OUT_FEATURES,),
                           minval=-bound, maxval=bound, dtype=jnp.float32)

    # 1) Small batch (spec-consistent shape): fast XLA path.
    batch = 8
    x = jax.random.normal(k_x, (batch, IN_FEATURES), dtype=jnp.float32)
    y = net_forward(x, w, b)
    jax.block_until_ready(y)
    y_ref = x @ w.T + b
    assert y.shape == (batch, OUT_FEATURES)
    assert jnp.allclose(y, y_ref, atol=1e-5, rtol=1e-5)

    # 2) Larger even batch: lane-packed Pallas kernel path (128/256 lanes).
    batch2 = 2048
    x2 = jax.random.normal(k_x, (batch2, IN_FEATURES), dtype=jnp.float32)
    y2 = net_forward(x2, w, b)
    jax.block_until_ready(y2)
    y2_ref = x2 @ w.T + b
    assert y2.shape == (batch2, OUT_FEATURES)
    assert jnp.allclose(y2, y2_ref, atol=1e-5, rtol=1e-5)

    # 3) Odd, non-tile-aligned batch: pack=1 fallback + ragged last grid tile,
    #    no wrapper-side pad/slice copies.
    batch3 = 1037
    x3 = jax.random.normal(k_x, (batch3, IN_FEATURES), dtype=jnp.float32)
    y3 = net_forward(x3, w, b)
    jax.block_until_ready(y3)
    y3_ref = x3 @ w.T + b
    assert y3.shape == (batch3, OUT_FEATURES)
    assert jnp.allclose(y3, y3_ref, atol=1e-5, rtol=1e-5)

    print("KERNEL_OK")
</pallas_src>

<mosaic_0001>
module attributes {stable_mosaic.version = 11 : i64} {
  func.func @linear_kernel(%arg0: i32, %arg1: memref<256x256xf32, #tpu.memory_space<vmem>>, %arg2: memref<256x256xf32, #tpu.memory_space<vmem>>, %arg3: memref<1x256xf32, #tpu.memory_space<vmem>>, %arg4: memref<256x256xf32, #tpu.memory_space<vmem>>) attributes {dimension_semantics = [#tpu.dimension_semantics<parallel>], iteration_bounds = array<i64: 2>, scalar_prefetch = 0 : i64, scratch_operands = 0 : i64, tpu.core_type = #tpu.core_type<tc>, window_params = [{transform_indices = @transform_0, window_bounds = array<i64: 256, 256>}, {pipeline_mode = #tpu.pipeline_mode<synchronous>, transform_indices = @transform_1, window_bounds = array<i64: 256, 256>}, {pipeline_mode = #tpu.pipeline_mode<synchronous>, transform_indices = @transform_2, window_bounds = array<i64: 1, 256>}, {transform_indices = @transform_3, window_bounds = array<i64: 256, 256>}]} {
    %c0 = arith.constant 0 : index
    %c0_0 = arith.constant 0 : index
    %0 = vector.load %arg1[%c0, %c0_0] : memref<256x256xf32, #tpu.memory_space<vmem>>, vector<256x256xf32>
    %c0_1 = arith.constant 0 : index
    %c0_2 = arith.constant 0 : index
    %1 = vector.load %arg2[%c0_1, %c0_2] : memref<256x256xf32, #tpu.memory_space<vmem>>, vector<256x256xf32>
    %cst = arith.constant dense<0.000000e+00> : vector<256x256xf32>
    %2 = tpu.matmul %0, %1, %cst {dimension_numbers = #tpu.dot_dimension_numbers<[1], [0], [0], [1], [0, 0, 1, 1], [], []>} : vector<256x256xf32>, vector<256x256xf32>, vector<256x256xf32> -> vector<256x256xf32>
    %c0_3 = arith.constant 0 : index
    %c0_4 = arith.constant 0 : index
    %3 = vector.load %arg3[%c0_3, %c0_4] : memref<1x256xf32, #tpu.memory_space<vmem>>, vector<1x256xf32>
    %4 = vector.broadcast %3 : vector<1x256xf32> to vector<256x256xf32>
    %5 = arith.addf %2, %4 : vector<256x256xf32>
    %c0_5 = arith.constant 0 : index
    %c0_6 = arith.constant 0 : index
    %6 = vector.load %arg4[%c0_5, %c0_6] : memref<256x256xf32, #tpu.memory_space<vmem>>, vector<256x256xf32>
    tpu.vector_store %arg4[%c0_5, %c0_6], %5 {strides = array<i32>} : memref<256x256xf32, #tpu.memory_space<vmem>>, vector<256x256xf32>,
    return
  }
  func.func @transform_0(%arg0: i32) -> (i32, i32) {
    %c0_i32 = arith.constant 0 : i32
    %c0_i32_0 = arith.constant 0 : i32
    return %arg0, %c0_i32 : i32, i32
  }
  func.func @transform_1(%arg0: i32) -> (i32, i32) {
    %c0_i32 = arith.constant 0 : i32
    %c0_i32_0 = arith.constant 0 : i32
    %c0_i32_1 = arith.constant 0 : i32
    return %c0_i32, %c0_i32_0 : i32, i32
  }
  func.func @transform_2(%arg0: i32) -> (i32, i32) {
    %c0_i32 = arith.constant 0 : i32
    %c0_i32_0 = arith.constant 0 : i32
    %c0_i32_1 = arith.constant 0 : i32
    return %c0_i32, %c0_i32_0 : i32, i32
  }
  func.func @transform_3(%arg0: i32) -> (i32, i32) {
    %c0_i32 = arith.constant 0 : i32
    %c0_i32_0 = arith.constant 0 : i32
    return %arg0, %c0_i32 : i32, i32
  }
}

</mosaic_0001>

<llo_original>
// kernel: tpu_custom_call.1
$region0: #{tpu_custom_call.1}
  #allocation0 [shape = 'u32[]', space=smem, size = 0x4, offset = 0x4, fixed_abs, tag = 'smem constant byte address 0x4 - core index']
  #allocation1 [shape = 'u32[144,128]{1,0:T(1,128)}', space=vmem, size = 0x12000, scoped, tag = 'internal scratch']
  %s0 = inlined_call_operand.hbm [shape: f32[512,256], index: 0, kind: input, shape index: {}]
  %s1 = inlined_call_operand.hbm [shape: f32[256,256], index: 1, kind: input, shape index: {}]
  %s2 = inlined_call_operand.vmem [shape: f32[1,256], index: 2, kind: input, shape index: {}]
  %s3 = inlined_call_operand.hbm [shape: f32[512,256], index: 3, kind: output, shape index: {}]
  %s4 = sld [smem:[#allocation0]]
  $region53: #{tpu_custom_call.1} parent=0
    _
  %s6 = ssub.s32 1, %s4
  %s7 = scalar_select 0, %s6, %s4
  $region1: #{tpu_custom_call.1} parent=0
    #allocation2 [shape = 'u8[524288]{0}', space=vmem, size = 0x80000, scoped, tag = 'input window, operand 0']
    #allocation3 [shape = 's32[2]{0}', space=sflag, size = 0x8, scoped, tag = 'scoped memory for tpu_custom_call.1']
    #allocation4 [shape = 's32[2]{0}', space=sflag, size = 0x8, scoped, tag = 'scoped memory for tpu_custom_call.1']
    #allocation5 [shape = 'u8[262144]{0}', space=vmem, size = 0x40000, scoped, tag = 'input window, operand 1, single buffered']
    #allocation6 [shape = 's32[1]{0}', space=sflag, size = 0x4, scoped, tag = 'scoped memory for tpu_custom_call.1']
    #allocation7 [shape = 'u8[524288]{0}', space=vmem, size = 0x80000, scoped, tag = 'output window, operand 0']
    %8 = vsyncpa [#allocation3], 0
    %s9 = scalar_lea.sflag [#allocation3], 1
    %10 = vsyncpa %s9, 0
    %11 = vsyncpa [#allocation6], 0
    %12 = vsyncpa [#allocation4], 0
    %s13 = scalar_lea.sflag [#allocation4], 1
    %14 = vsyncpa %s13, 0
    loop: start=0, step=1, limit=4
    $region2: #{tpu_custom_call.1} parent=1 // loop_pre_header
      _
    $region3: #{tpu_custom_call.1} parent=1 // loop_header
      %s16 = sphi 0, %s20
      %p17 = scmp.ge.s32.totalorder %s16, 4
      %s26 = sphi 0, %s28
      %s29 = sphi 0, %s26
      %s30 = sphi 0, %s29
      %s46 = sphi 0, %s30
      %s50 = sphi 0, %s50
      %s52 = sphi 0, %s50
      %s53 = sphi 0, %s52
      %s67 = sphi 0, %s53
      %s71 = sphi 0, %s71
      %s73 = sphi 0, %s71
      %s74 = sphi 0, %s73
      %s88 = sphi 0, %s74
      %s94 = sphi 0, %s96
      %s97 = sphi 0, %s94
      %s98 = sphi 0, %s97
      %s114 = sphi 0, %s98
    $region4: #{tpu_custom_call.1} parent=1 // loop_header_branch
      %19 = sbr.rel (%p17) target = $region8
    $region5: #{tpu_custom_call.1} parent=1 // loop_body
      %s21 = ssub.s32 %s16, 1
      %s22 = ssub.s32 %s16, 2
      %s23 = sadd.s32 %s16, 1
      %s24 = ssub.s32 %s16, %s23
      %p25 = scmp.eq.s32.totalorder %s24, 0
      %s27 = sadd.s32 %s26, 1
      %s28 = scalar_select %p25, %s26, %s27
      %p31 = pneg %p25
      %p32 = scmp.eq.s32.totalorder %s16, 1
      %p33 = por %p31, %p32
      %p34 = scmp.ne.s32.totalorder %s26, %s29
      %p35 = scmp.eq.s32.totalorder %s16, 0
      %p36 = por %p34, %p35
      %p37 = scmp.ne.s32.totalorder %s26, %s29
      %p38 = scmp.eq.s32.totalorder %s21, 1
      %p39 = por %p37, %p38
      %p40 = scmp.ne.s32.totalorder %s29, %s30
      %p41 = scmp.eq.s32.totalorder %s21, 0
      %p42 = por %p40, %p41
      %p43 = scmp.ne.s32.totalorder %s29, %s30
      %p44 = scmp.eq.s32.totalorder %s22, 1
      %p45 = por %p43, %p44
      %p47 = scmp.ne.s32.totalorder %s30, %s46
      %p48 = scmp.eq.s32.totalorder %s22, 0
      %p49 = por %p47, %p48
      %s51 = sadd.s32 %s50, 1
      %p54 = scmp.eq.s32.totalorder %s16, 1
      %p55 = scmp.ne.s32.totalorder %s50, %s52
      %p56 = scmp.eq.s32.totalorder %s16, 0
      %p57 = por %p55, %p56
      %p58 = scmp.ne.s32.totalorder %s50, %s52
      %p59 = scmp.eq.s32.totalorder %s21, 1
      %p60 = por %p58, %p59
      %p61 = scmp.ne.s32.totalorder %s52, %s53
      %p62 = scmp.eq.s32.totalorder %s21, 0
      %p63 = por %p61, %p62
      %p64 = scmp.ne.s32.totalorder %s52, %s53
      %p65 = scmp.eq.s32.totalorder %s22, 1
      %p66 = por %p64, %p65
      %p68 = scmp.ne.s32.totalorder %s53, %s67
      %p69 = scmp.eq.s32.totalorder %s22, 0
      %p70 = por %p68, %p69
      %s72 = sadd.s32 %s71, 1
      %p75 = scmp.eq.s32.totalorder %s16, 1
      %p76 = scmp.ne.s32.totalorder %s71, %s73
      %p77 = scmp.eq.s32.totalorder %s16, 0
      %p78 = por %p76, %p77
      %p79 = scmp.ne.s32.totalorder %s71, %s73
      %p80 = scmp.eq.s32.totalorder %s21, 1
      %p81 = por %p79, %p80
      %p82 = scmp.ne.s32.totalorder %s73, %s74
      %p83 = scmp.eq.s32.totalorder %s21, 0
      %p84 = por %p82, %p83
      %p85 = scmp.ne.s32.totalorder %s73, %s74
      %p86 = scmp.eq.s32.totalorder %s22, 1
      %p87 = por %p85, %p86
      %p89 = scmp.ne.s32.totalorder %s74, %s88
      %p90 = scmp.eq.s32.totalorder %s22, 0
      %p91 = por %p89, %p90
      %s92 = ssub.s32 %s16, %s23
      %p93 = scmp.eq.s32.totalorder %s92, 0
      %s95 = sadd.s32 %s94, 1
      %s96 = scalar_select %p93, %s94, %s95
      %p99 = pneg %p93
      %p100 = scmp.eq.s32.totalorder %s16, 1
      %p101 = por %p99, %p100
      %p102 = scmp.ne.s32.totalorder %s94, %s97
      %p103 = scmp.eq.s32.totalorder %s16, 0
      %p104 = por %p102, %p103
      %p105 = scmp.ne.s32.totalorder %s94, %s97
      %p106 = scmp.eq.s32.totalorder %s21, 1
      %p107 = por %p105, %p106
      %p108 = scmp.ne.s32.totalorder %s97, %s98
      %p109 = scmp.eq.s32.totalorder %s21, 0
      %p110 = por %p108, %p109
      %p111 = scmp.ne.s32.totalorder %s97, %s98
      %p112 = scmp.eq.s32.totalorder %s22, 1
      %p113 = por %p111, %p112
      %p115 = scmp.ne.s32.totalorder %s98, %s114
      %p116 = scmp.eq.s32.totalorder %s22, 0
      %p117 = por %p115, %p116
      %p118 = scmp.le.s32.totalorder 1, %s16
      %p119 = scmp.lt.s32.totalorder %s16, 3
      %p120 = pnand %p118, %p119
      %p121 = pneg %p120
      // Predicated region
      $region9: #{tpu_custom_call.1} parent=5 // pred_check
        _
      $region10: #{tpu_custom_call.1} parent=5 // pred_check_branch
        %123 = sbr.rel (%p120) target = $region12
      $region11: #{tpu_custom_call.1} parent=5 // pred_region
        %s124 = ssub.s32 %s16, 1
        // Predicated region
        $region13: #{tpu_custom_call.1} parent=11 // pred_check
          %p125 = pneg %p63
        $region14: #{tpu_custom_call.1} parent=11 // pred_check_branch
          %127 = sbr.rel (%p125) target = $region16
        $region15: #{tpu_custom_call.1} parent=11 // pred_region
          %s129 = ssub.s32 8192, 8192
          %130 = vsyncadd [#allocation6], %s129
          %s131 = sshll.u32 [#allocation5], 4
          %s132 = int_to_ptr.vmem [resolvable:$true] %s131
          %137 = dma.hbm_to_vmem [thread:$0]  %s1, 8192, %s132, [#allocation6], 256, 256, 16
        $region16: #{tpu_custom_call.1} parent=11 // pred_fallthru
          _
        // Predicated region
        $region17: #{tpu_custom_call.1} parent=11 // pred_check
          %p138 = pneg %p84
        $region18: #{tpu_custom_call.1} parent=11 // pred_check_branch
          %140 = sbr.rel (%p138) target = $region20
        $region19: #{tpu_custom_call.1} parent=11 // pred_region
          _
        $region20: #{tpu_custom_call.1} parent=11 // pred_fallthru
          _
      $region12: #{tpu_custom_call.1} parent=5 // pred_fallthru
        _
      %p141 = scmp.lt.s32.totalorder %s16, 2
      // Predicated region
      $region21: #{tpu_custom_call.1} parent=5 // pred_check
        %p142 = pneg %p141
      $region22: #{tpu_custom_call.1} parent=5 // pred_check_branch
        %144 = sbr.rel (%p142) target = $region24
      $region23: #{tpu_custom_call.1} parent=5 // pred_region
        // Predicated region
        $region25: #{tpu_custom_call.1} parent=23 // pred_check
          %p145 = pneg %p36
        $region26: #{tpu_custom_call.1} parent=23 // pred_check_branch
          %147 = sbr.rel (%p145) target = $region28
        $region27: #{tpu_custom_call.1} parent=23 // pred_region
          %s148 = sand.u32 %s26, 1
          %s149 = scalar_lea.sflag [#allocation3], %s148
          %s150 = sand.u32 %s26, 1
          %s151 = smul.addr %s150, 512
          %s152 = scalar_lea.vmem [#allocation2], %s151
          %s153 = smul.u32 32, %s16
          %s155 = ssub.s32 8192, 8192
          %156 = vsyncadd %s149, %s155
          %s157 = smul.addr %s153, 2
          %s158 = smul.addr %s157, 128
          %s159 = scalar_lea.hbm %s0, %s158
          %s160 = sshll.u32 %s152, 4
          %s161 = int_to_ptr.vmem [resolvable:$true] %s160
          %166 = dma.hbm_to_vmem [thread:$0]  %s159, 8192, %s161, %s149, 256, 256, 16
        $region28: #{tpu_custom_call.1} parent=23 // pred_fallthru
          _
      $region24: #{tpu_custom_call.1} parent=5 // pred_fallthru
        _
      %p167 = scmp.le.s32.totalorder 1, %s16
      %p168 = scmp.lt.s32.totalorder %s16, 3
      %p169 = pnand %p167, %p168
      %p170 = pneg %p169
      // Predicated region
      $region29: #{tpu_custom_call.1} parent=5 // pred_check
        _
      $region30: #{tpu_custom_call.1} parent=5 // pred_check_branch
        %172 = sbr.rel (%p169) target = $region32
      $region31: #{tpu_custom_call.1} parent=5 // pred_region
        %s173 = ssub.s32 %s16, 1
        %s174 = sand.u32 %s29, 1
        %s175 = scalar_lea.sflag [#allocation3], %s174
        %s176 = sand.u32 %s29, 1
        %s177 = smul.addr %s176, 512
        %s178 = scalar_lea.vmem [#allocation2], %s177
        // Predicated region
        $region33: #{tpu_custom_call.1} parent=31 // pred_check
          %p179 = pneg %p42
        $region34: #{tpu_custom_call.1} parent=31 // pred_check_branch
          %181 = sbr.rel (%p179) target = $region36
        $region35: #{tpu_custom_call.1} parent=31 // pred_region
          %182 = dma.done %s175, 8192
        $region36: #{tpu_custom_call.1} parent=31 // pred_fallthru
          _
        // Predicated region
        $region37: #{tpu_custom_call.1} parent=31 // pred_check
          %p183 = pneg %p63
        $region38: #{tpu_custom_call.1} parent=31 // pred_check_branch
          %185 = sbr.rel (%p183) target = $region40
        $region39: #{tpu_custom_call.1} parent=31 // pred_region
          %186 = dma.done [#allocation6], 8192
        $region40: #{tpu_custom_call.1} parent=31 // pred_fallthru
          _
        %s187 = sand.u32 %s29, 1
        %s188 = scalar_lea.sflag [#allocation3], %s187
        %s189 = sand.u32 %s29, 1
        %s190 = smul.addr %s189, 512
        %s191 = scalar_lea.vmem [#allocation2], %s190
        %p192 = pneg %p42
        %p193 = pneg %p39
        %p194 = pneg %p63
        %p195 = pneg %p60
        %p196 = pneg %p84
        %p197 = pneg %p81
        %p198 = pneg %p110
        %p199 = pneg %p107
        %s200 = sand.u32 %s97, 1
        %s201 = scalar_lea.sflag [#allocation4], %s200
        %s202 = sand.u32 %s97, 1
        %s203 = smul.addr %s202, 512
        %s204 = scalar_lea.vmem [#allocation7], %s203
        %s205 = smul.u32 32, %s21
        %s206 = smul.u32 32, %s21
        %v207 = vld [vmem:[%s178] sm:$0xff]
        %v208 = vld [vmem:[%s178 + $0x8] sm:$0xff]
        %v209 = vld [vmem:[%s178 + $0x10] sm:$0xff]
        %v210 = vld [vmem:[%s178 + $0x18] sm:$0xff]
        %v211 = vld [vmem:[%s178 + $0x20] sm:$0xff]
        %v212 = vld [vmem:[%s178 + $0x28] sm:$0xff]
        %v213 = vld [vmem:[%s178 + $0x30] sm:$0xff]
        %v214 = vld [vmem:[%s178 + $0x38] sm:$0xff]
        %v215 = vld [vmem:[%s178 + $0x40] sm:$0xff]
        %v216 = vld [vmem:[%s178 + $0x48] sm:$0xff]
        %v217 = vld [vmem:[%s178 + $0x50] sm:$0xff]
        %v218 = vld [vmem:[%s178 + $0x58] sm:$0xff]
        %v219 = vld [vmem:[%s178 + $0x60] sm:$0xff]
        %v220 = vld [vmem:[%s178 + $0x68] sm:$0xff]
        %v221 = vld [vmem:[%s178 + $0x70] sm:$0xff]
        %v222 = vld [vmem:[%s178 + $0x78] sm:$0xff]
        %v223 = vld [vmem:[%s178 + $0x80] sm:$0xff]
        %v224 = vld [vmem:[%s178 + $0x88] sm:$0xff]
        %v225 = vld [vmem:[%s178 + $0x90] sm:$0xff]
        %v226 = vld [vmem:[%s178 + $0x98] sm:$0xff]
        %v227 = vld [vmem:[%s178 + $0xa0] sm:$0xff]
        %v228 = vld [vmem:[%s178 + $0xa8] sm:$0xff]
        %v229 = vld [vmem:[%s178 + $0xb0] sm:$0xff]
        %v230 = vld [vmem:[%s178 + $0xb8] sm:$0xff]
        %v231 = vld [vmem:[%s178 + $0xc0] sm:$0xff]
        %v232 = vld [vmem:[%s178 + $0xc8] sm:$0xff]
        %v233 = vld [vmem:[%s178 + $0xd0] sm:$0xff]
        %v234 = vld [vmem:[%s178 + $0xd8] sm:$0xff]
        %v235 = vld [vmem:[%s178 + $0xe0] sm:$0xff]
        %v236 = vld [vmem:[%s178 + $0xe8] sm:$0xff]
        %v237 = vld [vmem:[%s178 + $0xf0] sm:$0xff]
        %v238 = vld [vmem:[%s178 + $0xf8] sm:$0xff]
        %v239 = vld [vmem:[%s178 + $0x100] sm:$0xff]
        %v240 = vld [vmem:[%s178 + $0x108] sm:$0xff]
        %v241 = vld [vmem:[%s178 + $0x110] sm:$0xff]
        %v242 = vld [vmem:[%s178 + $0x118] sm:$0xff]
        %v243 = vld [vmem:[%s178 + $0x120] sm:$0xff]
        %v244 = vld [vmem:[%s178 + $0x128] sm:$0xff]
        %v245 = vld [vmem:[%s178 + $0x130] sm:$0xff]
        %v246 = vld [vmem:[%s178 + $0x138] sm:$0xff]
        %v247 = vld [vmem:[%s178 + $0x140] sm:$0xff]
        %v248 = vld [vmem:[%s178 + $0x148] sm:$0xff]
        %v249 = vld [vmem:[%s178 + $0x150] sm:$0xff]
        %v250 = vld [vmem:[%s178 + $0x158] sm:$0xff]
        %v251 = vld [vmem:[%s178 + $0x160] sm:$0xff]
        %v252 = vld [vmem:[%s178 + $0x168] sm:$0xff]
        %v253 = vld [vmem:[%s178 + $0x170] sm:$0xff]
        %v254 = vld [vmem:[%s178 + $0x178] sm:$0xff]
        %v255 = vld [vmem:[%s178 + $0x180] sm:$0xff]
        %v256 = vld [vmem:[%s178 + $0x188] sm:$0xff]
        %v257 = vld [vmem:[%s178 + $0x190] sm:$0xff]
        %v258 = vld [vmem:[%s178 + $0x198] sm:$0xff]
        %v259 = vld [vmem:[%s178 + $0x1a0] sm:$0xff]
        %v260 = vld [vmem:[%s178 + $0x1a8] sm:$0xff]
        %v261 = vld [vmem:[%s178 + $0x1b0] sm:$0xff]
        %v262 = vld [vmem:[%s178 + $0x1b8] sm:$0xff]
        %v263 = vld [vmem:[%s178 + $0x1c0] sm:$0xff]
        %v264 = vld [vmem:[%s178 + $0x1c8] sm:$0xff]
        %v265 = vld [vmem:[%s178 + $0x1d0] sm:$0xff]
        %v266 = vld [vmem:[%s178 + $0x1d8] sm:$0xff]
        %v267 = vld [vmem:[%s178 + $0x1e0] sm:$0xff]
        %v268 = vld [vmem:[%s178 + $0x1e8] sm:$0xff]
        %v269 = vld [vmem:[%s178 + $0x1f0] sm:$0xff]
        %v270 = vld [vmem:[%s178 + $0x1f8] sm:$0xff]
        %v271 = vld [vmem:[#allocation5] sm:$0xff]
        %v272 = vld [vmem:[#allocation5 + $0x8] sm:$0xff]
        %v273 = vld [vmem:[#allocation5 + $0x10] sm:$0xff]
        %v274 = vld [vmem:[#allocation5 + $0x18] sm:$0xff]
        %v275 = vld [vmem:[#allocation5 + $0x20] sm:$0xff]
        %v276 = vld [vmem:[#allocation5 + $0x28] sm:$0xff]
        %v277 = vld [vmem:[#allocation5 + $0x30] sm:$0xff]
        %v278 = vld [vmem:[#allocation5 + $0x38] sm:$0xff]
        %v279 = vld [vmem:[#allocation5 + $0x40] sm:$0xff]
        %v280 = vld [vmem:[#allocation5 + $0x48] sm:$0xff]
        %v281 = vld [vmem:[#allocation5 + $0x50] sm:$0xff]
        %v282 = vld [vmem:[#allocation5 + $0x58] sm:$0xff]
        %v283 = vld [vmem:[#allocation5 + $0x60] sm:$0xff]
        %v284 = vld [vmem:[#allocation5 + $0x68] sm:$0xff]
        %v285 = vld [vmem:[#allocation5 + $0x70] sm:$0xff]
        %v286 = vld [vmem:[#allocation5 + $0x78] sm:$0xff]
        %v287 = vld [vmem:[#allocation5 + $0x80] sm:$0xff]
        %v288 = vld [vmem:[#allocation5 + $0x88] sm:$0xff]
        %v289 = vld [vmem:[#allocation5 + $0x90] sm:$0xff]
        %v290 = vld [vmem:[#allocation5 + $0x98] sm:$0xff]
        %v291 = vld [vmem:[#allocation5 + $0xa0] sm:$0xff]
        %v292 = vld [vmem:[#allocation5 + $0xa8] sm:$0xff]
        %v293 = vld [vmem:[#allocation5 + $0xb0] sm:$0xff]
        %v294 = vld [vmem:[#allocation5 + $0xb8] sm:$0xff]
        %v295 = vld [vmem:[#allocation5 + $0xc0] sm:$0xff]
        %v296 = vld [vmem:[#allocation5 + $0xc8] sm:$0xff]
        %v297 = vld [vmem:[#allocation5 + $0xd0] sm:$0xff]
        %v298 = vld [vmem:[#allocation5 + $0xd8] sm:$0xff]
        %v299 = vld [vmem:[#allocation5 + $0xe0] sm:$0xff]
        %v300 = vld [vmem:[#allocation5 + $0xe8] sm:$0xff]
        %v301 = vld [vmem:[#allocation5 + $0xf0] sm:$0xff]
        %v302 = vld [vmem:[#allocation5 + $0xf8] sm:$0xff]
        %v303 = vld [vmem:[#allocation5 + $0x100] sm:$0xff]
        %v304 = vld [vmem:[#allocation5 + $0x108] sm:$0xff]
        %v305 = vld [vmem:[#allocation5 + $0x110] sm:$0xff]
        %v306 = vld [vmem:[#allocation5 + $0x118] sm:$0xff]
        %v307 = vld [vmem:[#allocation5 + $0x120] sm:$0xff]
        %v308 = vld [vmem:[#allocation5 + $0x128] sm:$0xff]
        %v309 = vld [vmem:[#allocation5 + $0x130] sm:$0xff]
        %v310 = vld [vmem:[#allocation5 + $0x138] sm:$0xff]
        %v311 = vld [vmem:[#allocation5 + $0x140] sm:$0xff]
        %v312 = vld [vmem:[#allocation5 + $0x148] sm:$0xff]
        %v313 = vld [vmem:[#allocation5 + $0x150] sm:$0xff]
        %v314 = vld [vmem:[#allocation5 + $0x158] sm:$0xff]
        %v315 = vld [vmem:[#allocation5 + $0x160] sm:$0xff]
        %v316 = vld [vmem:[#allocation5 + $0x168] sm:$0xff]
        %v317 = vld [vmem:[#allocation5 + $0x170] sm:$0xff]
        %v318 = vld [vmem:[#allocation5 + $0x178] sm:$0xff]
        %v319 = vld [vmem:[#allocation5 + $0x180] sm:$0xff]
        %v320 = vld [vmem:[#allocation5 + $0x188] sm:$0xff]
        %v321 = vld [vmem:[#allocation5 + $0x190] sm:$0xff]
        %v322 = vld [vmem:[#allocation5 + $0x198] sm:$0xff]
        %v323 = vld [vmem:[#allocation5 + $0x1a0] sm:$0xff]
        %v324 = vld [vmem:[#allocation5 + $0x1a8] sm:$0xff]
        %v325 = vld [vmem:[#allocation5 + $0x1b0] sm:$0xff]
        %v326 = vld [vmem:[#allocation5 + $0x1b8] sm:$0xff]
        %v327 = vld [vmem:[#allocation5 + $0x1c0] sm:$0xff]
        %v328 = vld [vmem:[#allocation5 + $0x1c8] sm:$0xff]
        %v329 = vld [vmem:[#allocation5 + $0x1d0] sm:$0xff]
        %v330 = vld [vmem:[#allocation5 + $0x1d8] sm:$0xff]
        %v331 = vld [vmem:[#allocation5 + $0x1e0] sm:$0xff]
        %v332 = vld [vmem:[#allocation5 + $0x1e8] sm:$0xff]
        %v333 = vld [vmem:[#allocation5 + $0x1f0] sm:$0xff]
        %v334 = vld [vmem:[#allocation5 + $0x1f8] sm:$0xff]
        %v335 = vld [vmem:[%s2] sm:$0x3]
        %v337 = vlaneseq
        %v338 = vshrl.u32 %v337, 7
        %v339 = vsub.s32 0, %v338
        %v340 = vrot.slane %v335, %v339
        %v341 = vlaneseq
        %v342 = vshrl.u32 %v341, 7
        %v343 = vsub.s32 1, %v342
        %v344 = vrot.slane %v335, %v343
        %347 = vmatprep.subr.mxu0 %v272
        %348 = vmatpush1.msra.mxu0 %v271
        %349 = vmatprep.subr.mxu0 %v274
        %350 = vmatpush1.msra.mxu0 %v273
        %351 = vmatprep.subr.mxu0 %v276
        %352 = vmatpush1.msra.mxu0 %v275
        %353 = vmatprep.subr.mxu0 %v278
        %354 = vmatpush1.msra.mxu0 %v277
        %355 = vmatprep.subr.mxu0 %v280
        %356 = vmatpush1.msra.mxu0 %v279
        %357 = vmatprep.subr.mxu0 %v282
        %358 = vmatpush1.msra.mxu0 %v281
        %359 = vmatprep.subr.mxu0 %v284
        %360 = vmatpush1.msra.mxu0 %v283
        %361 = vmatprep.subr.mxu0 %v286
        %362 = vmatpush1.msra.mxu0 %v285
        %363 = vmatprep.subr.mxu0 %v288
        %364 = vmatpush1.msra.mxu0 %v287
        %365 = vmatprep.subr.mxu0 %v290
        %366 = vmatpush1.msra.mxu0 %v289
        %367 = vmatprep.subr.mxu0 %v292
        %368 = vmatpush1.msra.mxu0 %v291
        %369 = vmatprep.subr.mxu0 %v294
        %370 = vmatpush1.msra.mxu0 %v293
        %371 = vmatprep.subr.mxu0 %v296
        %372 = vmatpush1.msra.mxu0 %v295
        %373 = vmatprep.subr.mxu0 %v298
        %374 = vmatpush1.msra.mxu0 %v297
        %375 = vmatprep.subr.mxu0 %v300
        %376 = vmatpush1.msra.mxu0 %v299
        %377 = vmatprep.subr.mxu0 %v302
        %378 = vmatpush1.msra.mxu0 %v301
        %379 = vmatprep.subr.mxu0 %v304
        %380 = vmatpush1.msra.mxu0 %v303
        %381 = vmatprep.subr.mxu0 %v306
        %382 = vmatpush1.msra.mxu0 %v305
        %383 = vmatprep.subr.mxu0 %v308
        %384 = vmatpush1.msra.mxu0 %v307
        %385 = vmatprep.subr.mxu0 %v310
        %386 = vmatpush1.msra.mxu0 %v309
        %387 = vmatprep.subr.mxu0 %v312
        %388 = vmatpush1.msra.mxu0 %v311
        %389 = vmatprep.subr.mxu0 %v314
        %390 = vmatpush1.msra.mxu0 %v313
        %391 = vmatprep.subr.mxu0 %v316
        %392 = vmatpush1.msra.mxu0 %v315
        %393 = vmatprep.subr.mxu0 %v318
        %394 = vmatpush1.msra.mxu0 %v317
        %395 = vmatprep.subr.mxu0 %v320
        %396 = vmatpush1.msra.mxu0 %v319
        %397 = vmatprep.subr.mxu0 %v322
        %398 = vmatpush1.msra.mxu0 %v321
        %399 = vmatprep.subr.mxu0 %v324
        %400 = vmatpush1.msra.mxu0 %v323
        %401 = vmatprep.subr.mxu0 %v326
        %402 = vmatpush1.msra.mxu0 %v325
        %403 = vmatprep.subr.mxu0 %v328
        %404 = vmatpush1.msra.mxu0 %v327
        %405 = vmatprep.subr.mxu0 %v330
        %406 = vmatpush1.msra.mxu0 %v329
        %407 = vmatprep.subr.mxu0 %v332
        %408 = vmatpush1.msra.mxu0 %v331
        %409 = vmatprep.subr.mxu0 %v334
        %410 = vmatpush1.msra.mxu0 %v333
        %411 = vmatprep.mubr.f32.mxu0 %v208
        %412 = vmatmul.mubr.f32.gmra.mrb[0].mxu0 %v207
        %v413 = vpop.f32.mrb[0].mxu0
        %v414 = vadd.f32 %v340, %v413
        %v415 = vpop.f32.mrb[0].mxu0
        %v416 = vadd.f32 %v344, %v415
        %417 = vmatprep.mubr.f32.mxu0 %v210
        %418 = vmatmul.mubr.f32.gmra.mrb[0].mxu0 %v209
        %v419 = vpop.f32.mrb[0].mxu0
        %v420 = vadd.f32 %v340, %v419
        %v421 = vpop.f32.mrb[0].mxu0
        %v422 = vadd.f32 %v344, %v421
        %423 = vmatprep.mubr.f32.mxu0 %v212
        %424 = vmatmul.mubr.f32.gmra.mrb[0].mxu0 %v211
        %v425 = vpop.f32.mrb[0].mxu0
        %v426 = vadd.f32 %v340, %v425
        %v427 = vpop.f32.mrb[0].mxu0
        %v428 = vadd.f32 %v344, %v427
        %429 = vmatprep.mubr.f32.mxu0 %v214
        %430 = vmatmul.mubr.f32.gmra.mrb[0].mxu0 %v213
        %v431 = vpop.f32.mrb[0].mxu0
        %v432 = vadd.f32 %v340, %v431
        %v433 = vpop.f32.mrb[0].mxu0
        %v434 = vadd.f32 %v344, %v433
        %435 = vmatprep.mubr.f32.mxu0 %v216
        %436 = vmatmul.mubr.f32.gmra.mrb[0].mxu0 %v215
        %v437 = vpop.f32.mrb[0].mxu0
        %v438 = vadd.f32 %v340, %v437
        %v439 = vpop.f32.mrb[0].mxu0
        %v440 = vadd.f32 %v344, %v439
        %441 = vmatprep.mubr.f32.mxu0 %v218
        %442 = vmatmul.mubr.f32.gmra.mrb[0].mxu0 %v217
        %v443 = vpop.f32.mrb[0].mxu0
        %v444 = vadd.f32 %v340, %v443
        %v445 = vpop.f32.mrb[0].mxu0
        %v446 = vadd.f32 %v344, %v445
        %447 = vmatprep.mubr.f32.mxu0 %v220
        %448 = vmatmul.mubr.f32.gmra.mrb[0].mxu0 %v219
        %v449 = vpop.f32.mrb[0].mxu0
        %v450 = vadd.f32 %v340, %v449
        %v451 = vpop.f32.mrb[0].mxu0
        %v452 = vadd.f32 %v344, %v451
        %453 = vmatprep.mubr.f32.mxu0 %v222
        %454 = vmatmul.mubr.f32.gmra.mrb[0].mxu0 %v221
        %v455 = vpop.f32.mrb[0].mxu0
        %v456 = vadd.f32 %v340, %v455
        %v457 = vpop.f32.mrb[0].mxu0
        %v458 = vadd.f32 %v344, %v457
        %459 = vmatprep.mubr.f32.mxu0 %v224
        %460 = vmatmul.mubr.f32.gmra.mrb[0].mxu0 %v223
        %v461 = vpop.f32.mrb[0].mxu0
        %v462 = vadd.f32 %v340, %v461
        %v463 = vpop.f32.mrb[0].mxu0
        %v464 = vadd.f32 %v344, %v463
        %465 = vmatprep.mubr.f32.mxu0 %v226
        %466 = vmatmul.mubr.f32.gmra.mrb[0].mxu0 %v225
        %v467 = vpop.f32.mrb[0].mxu0
        %v468 = vadd.f32 %v340, %v467
        %v469 = vpop.f32.mrb[0].mxu0
        %v470 = vadd.f32 %v344, %v469
        %471 = vmatprep.mubr.f32.mxu0 %v228
        %472 = vmatmul.mubr.f32.gmra.mrb[0].mxu0 %v227
        %v473 = vpop.f32.mrb[0].mxu0
        %v474 = vadd.f32 %v340, %v473
        %v475 = vpop.f32.mrb[0].mxu0
        %v476 = vadd.f32 %v344, %v475
        %477 = vmatprep.mubr.f32.mxu0 %v230
        %478 = vmatmul.mubr.f32.gmra.mrb[0].mxu0 %v229
        %v479 = vpop.f32.mrb[0].mxu0
        %v480 = vadd.f32 %v340, %v479
        %v481 = vpop.f32.mrb[0].mxu0
        %v482 = vadd.f32 %v344, %v481
        %483 = vmatprep.mubr.f32.mxu0 %v232
        %484 = vmatmul.mubr.f32.gmra.mrb[0].mxu0 %v231
        %v485 = vpop.f32.mrb[0].mxu0
        %v486 = vadd.f32 %v340, %v485
        %v487 = vpop.f32.mrb[0].mxu0
        %v488 = vadd.f32 %v344, %v487
        %489 = vmatprep.mubr.f32.mxu0 %v234
        %490 = vmatmul.mubr.f32.gmra.mrb[0].mxu0 %v233
        %v491 = vpop.f32.mrb[0].mxu0
        %v492 = vadd.f32 %v340, %v491
        %v493 = vpop.f32.mrb[0].mxu0
        %v494 = vadd.f32 %v344, %v493
        %495 = vmatprep.mubr.f32.mxu0 %v236
        %496 = vmatmul.mubr.f32.gmra.mrb[0].mxu0 %v235
        %v497 = vpop.f32.mrb[0].mxu0
        %v498 = vadd.f32 %v340, %v497
        %v499 = vpop.f32.mrb[0].mxu0
        %v500 = vadd.f32 %v344, %v499
        %501 = vmatprep.mubr.f32.mxu0 %v238
        %502 = vmatmul.mubr.f32.gmra.mrb[0].mxu0 %v237
        %v503 = vpop.f32.mrb[0].mxu0
        %v504 = vadd.f32 %v340, %v503
        %v505 = vpop.f32.mrb[0].mxu0
        %v506 = vadd.f32 %v344, %v505
        %507 = vmatprep.mubr.f32.mxu0 %v240
        %508 = vmatmul.mubr.f32.gmra.mrb[0].mxu0 %v239
        %v509 = vpop.f32.mrb[0].mxu0
        %v510 = vadd.f32 %v340, %v509
        %v511 = vpop.f32.mrb[0].mxu0
        %v512 = vadd.f32 %v344, %v511
        %513 = vmatprep.mubr.f32.mxu0 %v242
        %514 = vmatmul.mubr.f32.gmra.mrb[0].mxu0 %v241
        %v515 = vpop.f32.mrb[0].mxu0
        %v516 = vadd.f32 %v340, %v515
        %v517 = vpop.f32.mrb[0].mxu0
        %v518 = vadd.f32 %v344, %v517
        %519 = vmatprep.mubr.f32.mxu0 %v244
        %520 = vmatmul.mubr.f32.gmra.mrb[0].mxu0 %v243
        %v521 = vpop.f32.mrb[0].mxu0
        %v522 = vadd.f32 %v340, %v521
        %v523 = vpop.f32.mrb[0].mxu0
        %v524 = vadd.f32 %v344, %v523
        %525 = vmatprep.mubr.f32.mxu0 %v246
        %526 = vmatmul.mubr.f32.gmra.mrb[0].mxu0 %v245
        %v527 = vpop.f32.mrb[0].mxu0
        %v528 = vadd.f32 %v340, %v527
        %v529 = vpop.f32.mrb[0].mxu0
        %v530 = vadd.f32 %v344, %v529
        %531 = vmatprep.mubr.f32.mxu0 %v248
        %532 = vmatmul.mubr.f32.gmra.mrb[0].mxu0 %v247
        %v533 = vpop.f32.mrb[0].mxu0
        %v534 = vadd.f32 %v340, %v533
        %v535 = vpop.f32.mrb[0].mxu0
        %v536 = vadd.f32 %v344, %v535
        %537 = vmatprep.mubr.f32.mxu0 %v250
        %538 = vmatmul.mubr.f32.gmra.mrb[0].mxu0 %v249
        %v539 = vpop.f32.mrb[0].mxu0
        %v540 = vadd.f32 %v340, %v539
        %v541 = vpop.f32.mrb[0].mxu0
        %v542 = vadd.f32 %v344, %v541
        %543 = vmatprep.mubr.f32.mxu0 %v252
        %544 = vmatmul.mubr.f32.gmra.mrb[0].mxu0 %v251
        %v545 = vpop.f32.mrb[0].mxu0
        %v546 = vadd.f32 %v340, %v545
        %v547 = vpop.f32.mrb[0].mxu0
        %v548 = vadd.f32 %v344, %v547
        %549 = vmatprep.mubr.f32.mxu0 %v254
        %550 = vmatmul.mubr.f32.gmra.mrb[0].mxu0 %v253
        %v551 = vpop.f32.mrb[0].mxu0
        %v552 = vadd.f32 %v340, %v551
        %v553 = vpop.f32.mrb[0].mxu0
        %v554 = vadd.f32 %v344, %v553
        %555 = vmatprep.mubr.f32.mxu0 %v256
        %556 = vmatmul.mubr.f32.gmra.mrb[0].mxu0 %v255
        %v557 = vpop.f32.mrb[0].mxu0
        %v558 = vadd.f32 %v340, %v557
        %v559 = vpop.f32.mrb[0].mxu0
        %v560 = vadd.f32 %v344, %v559
        %561 = vmatprep.mubr.f32.mxu0 %v258
        %562 = vmatmul.mubr.f32.gmra.mrb[0].mxu0 %v257
        %v563 = vpop.f32.mrb[0].mxu0
        %v564 = vadd.f32 %v340, %v563
        %v565 = vpop.f32.mrb[0].mxu0
        %v566 = vadd.f32 %v344, %v565
        %567 = vmatprep.mubr.f32.mxu0 %v260
        %568 = vmatmul.mubr.f32.gmra.mrb[0].mxu0 %v259
        %v569 = vpop.f32.mrb[0].mxu0
        %v570 = vadd.f32 %v340, %v569
        %v571 = vpop.f32.mrb[0].mxu0
        %v572 = vadd.f32 %v344, %v571
        %573 = vmatprep.mubr.f32.mxu0 %v262
        %574 = vmatmul.mubr.f32.gmra.mrb[0].mxu0 %v261
        %v575 = vpop.f32.mrb[0].mxu0
        %v576 = vadd.f32 %v340, %v575
        %v577 = vpop.f32.mrb[0].mxu0
        %v578 = vadd.f32 %v344, %v577
        %579 = vmatprep.mubr.f32.mxu0 %v264
        %580 = vmatmul.mubr.f32.gmra.mrb[0].mxu0 %v263
        %v581 = vpop.f32.mrb[0].mxu0
        %v582 = vadd.f32 %v340, %v581
        %v583 = vpop.f32.mrb[0].mxu0
        %v584 = vadd.f32 %v344, %v583
        %585 = vmatprep.mubr.f32.mxu0 %v266
        %586 = vmatmul.mubr.f32.gmra.mrb[0].mxu0 %v265
        %v587 = vpop.f32.mrb[0].mxu0
        %v588 = vadd.f32 %v340, %v587
        %v589 = vpop.f32.mrb[0].mxu0
        %v590 = vadd.f32 %v344, %v589
        %591 = vmatprep.mubr.f32.mxu0 %v268
        %592 = vmatmul.mubr.f32.gmra.mrb[0].mxu0 %v267
        %v593 = vpop.f32.mrb[0].mxu0
        %v594 = vadd.f32 %v340, %v593
        %v595 = vpop.f32.mrb[0].mxu0
        %v596 = vadd.f32 %v344, %v595
        %597 = vmatprep.mubr.f32.mxu0 %v270
        %598 = vmatmul.mubr.f32.gmra.mrb[0].mxu0 %v269
        %v599 = vpop.f32.mrb[0].mxu0
        %v600 = vadd.f32 %v340, %v599
        %v601 = vpop.f32.mrb[0].mxu0
        %v602 = vadd.f32 %v344, %v601
        %603 = vdwg.mxu0
        %604 = vst [vmem:[%s204] sm:$0xff] %v414
        %605 = vst [vmem:[%s204 + $0x8] sm:$0xff] %v416
        %606 = vst [vmem:[%s204 + $0x10] sm:$0xff] %v420
        %607 = vst [vmem:[%s204 + $0x18] sm:$0xff] %v422
        %608 = vst [vmem:[%s204 + $0x20] sm:$0xff] %v426
        %609 = vst [vmem:[%s204 + $0x28] sm:$0xff] %v428
        %610 = vst [vmem:[%s204 + $0x30] sm:$0xff] %v432
        %611 = vst [vmem:[%s204 + $0x38] sm:$0xff] %v434
        %612 = vst [vmem:[%s204 + $0x40] sm:$0xff] %v438
        %613 = vst [vmem:[%s204 + $0x48] sm:$0xff] %v440
        %614 = vst [vmem:[%s204 + $0x50] sm:$0xff] %v444
        %615 = vst [vmem:[%s204 + $0x58] sm:$0xff] %v446
        %616 = vst [vmem:[%s204 + $0x60] sm:$0xff] %v450
        %617 = vst [vmem:[%s204 + $0x68] sm:$0xff] %v452
        %618 = vst [vmem:[%s204 + $0x70] sm:$0xff] %v456
        %619 = vst [vmem:[%s204 + $0x78] sm:$0xff] %v458
        %620 = vst [vmem:[%s204 + $0x80] sm:$0xff] %v462
        %621 = vst [vmem:[%s204 + $0x88] sm:$0xff] %v464
        %622 = vst [vmem:[%s204 + $0x90] sm:$0xff] %v468
        %623 = vst [vmem:[%s204 + $0x98] sm:$0xff] %v470
        %624 = vst [vmem:[%s204 + $0xa0] sm:$0xff] %v474
        %625 = vst [vmem:[%s204 + $0xa8] sm:$0xff] %v476
        %626 = vst [vmem:[%s204 + $0xb0] sm:$0xff] %v480
        %627 = vst [vmem:[%s204 + $0xb8] sm:$0xff] %v482
        %628 = vst [vmem:[%s204 + $0xc0] sm:$0xff] %v486
        %629 = vst [vmem:[%s204 + $0xc8] sm:$0xff] %v488
        %630 = vst [vmem:[%s204 + $0xd0] sm:$0xff] %v492
        %631 = vst [vmem:[%s204 + $0xd8] sm:$0xff] %v494
        %632 = vst [vmem:[%s204 + $0xe0] sm:$0xff] %v498
        %633 = vst [vmem:[%s204 + $0xe8] sm:$0xff] %v500
        %634 = vst [vmem:[%s204 + $0xf0] sm:$0xff] %v504
        %635 = vst [vmem:[%s204 + $0xf8] sm:$0xff] %v506
        %636 = vst [vmem:[%s204 + $0x100] sm:$0xff] %v510
        %637 = vst [vmem:[%s204 + $0x108] sm:$0xff] %v512
        %638 = vst [vmem:[%s204 + $0x110] sm:$0xff] %v516
        %639 = vst [vmem:[%s204 + $0x118] sm:$0xff] %v518
        %640 = vst [vmem:[%s204 + $0x120] sm:$0xff] %v522
        %641 = vst [vmem:[%s204 + $0x128] sm:$0xff] %v524
        %642 = vst [vmem:[%s204 + $0x130] sm:$0xff] %v528
        %643 = vst [vmem:[%s204 + $0x138] sm:$0xff] %v530
        %644 = vst [vmem:[%s204 + $0x140] sm:$0xff] %v534
        %645 = vst [vmem:[%s204 + $0x148] sm:$0xff] %v536
        %646 = vst [vmem:[%s204 + $0x150] sm:$0xff] %v540
        %647 = vst [vmem:[%s204 + $0x158] sm:$0xff] %v542
        %648 = vst [vmem:[%s204 + $0x160] sm:$0xff] %v546
        %649 = vst [vmem:[%s204 + $0x168] sm:$0xff] %v548
        %650 = vst [vmem:[%s204 + $0x170] sm:$0xff] %v552
        %651 = vst [vmem:[%s204 + $0x178] sm:$0xff] %v554
        %652 = vst [vmem:[%s204 + $0x180] sm:$0xff] %v558
        %653 = vst [vmem:[%s204 + $0x188] sm:$0xff] %v560
        %654 = vst [vmem:[%s204 + $0x190] sm:$0xff] %v564
        %655 = vst [vmem:[%s204 + $0x198] sm:$0xff] %v566
        %656 = vst [vmem:[%s204 + $0x1a0] sm:$0xff] %v570
        %657 = vst [vmem:[%s204 + $0x1a8] sm:$0xff] %v572
        %658 = vst [vmem:[%s204 + $0x1b0] sm:$0xff] %v576
        %659 = vst [vmem:[%s204 + $0x1b8] sm:$0xff] %v578
        %660 = vst [vmem:[%s204 + $0x1c0] sm:$0xff] %v582
        %661 = vst [vmem:[%s204 + $0x1c8] sm:$0xff] %v584
        %662 = vst [vmem:[%s204 + $0x1d0] sm:$0xff] %v588
        %663 = vst [vmem:[%s204 + $0x1d8] sm:$0xff] %v590
        %664 = vst [vmem:[%s204 + $0x1e0] sm:$0xff] %v594
        %665 = vst [vmem:[%s204 + $0x1e8] sm:$0xff] %v596
        %666 = vst [vmem:[%s204 + $0x1f0] sm:$0xff] %v600
        %667 = vst [vmem:[%s204 + $0x1f8] sm:$0xff] %v602
        %s668 = sand.u32 %s97, 1
        %s669 = scalar_lea.sflag [#allocation4], %s668
        %s670 = sand.u32 %s97, 1
        %s671 = smul.addr %s670, 512
        %s672 = scalar_lea.vmem [#allocation7], %s671
        // Predicated region
        $region41: #{tpu_custom_call.1} parent=31 // pred_check
          %p673 = pneg %p107
        $region42: #{tpu_custom_call.1} parent=31 // pred_check_branch
          %675 = sbr.rel (%p673) target = $region44
        $region43: #{tpu_custom_call.1} parent=31 // pred_region
          %s676 = smul.u32 32, %s21
          %s678 = ssub.s32 8192, 8192
          %679 = vsyncadd %s669, %s678
          %s680 = smul.addr %s676, 2
          %s681 = smul.addr %s680, 128
          %s682 = scalar_lea.hbm %s3, %s681
          %s683 = sshll.u32 %s672, 4
          %s684 = int_to_ptr.vmem [resolvable:$true] %s683
          %689 = dma.vmem_to_hbm [thread:$0]  %s684, 8192, %s682, %s669, 256, 256, 16
        $region44: #{tpu_custom_call.1} parent=31 // pred_fallthru
          _
      $region32: #{tpu_custom_call.1} parent=5 // pred_fallthru
        _
      %p690 = scmp.le.s32.totalorder 2, %s16
      // Predicated region
      $region45: #{tpu_custom_call.1} parent=5 // pred_check
        %p691 = pneg %p690
      $region46: #{tpu_custom_call.1} parent=5 // pred_check_branch
        %693 = sbr.rel (%p691) target = $region48
      $region47: #{tpu_custom_call.1} parent=5 // pred_region
        %s694 = ssub.s32 %s16, 2
        // Predicated region
        $region49: #{tpu_custom_call.1} parent=47 // pred_check
          %p695 = pneg %p113
        $region50: #{tpu_custom_call.1} parent=47 // pred_check_branch
          %697 = sbr.rel (%p695) target = $region52
        $region51: #{tpu_custom_call.1} parent=47 // pred_region
          %s698 = sand.u32 %s98, 1
          %s699 = scalar_lea.sflag [#allocation4], %s698
          %s700 = sand.u32 %s98, 1
          %s701 = smul.addr %s700, 512
          %s702 = scalar_lea.vmem [#allocation7], %s701
          %703 = dma.done %s699, 8192
        $region52: #{tpu_custom_call.1} parent=47 // pred_fallthru
          _
      $region48: #{tpu_custom_call.1} parent=5 // pred_fallthru
        _
    $region6: #{tpu_custom_call.1} parent=1 // loop_footer
      %s20 = sadd.s32 1, %s16
    $region7: #{tpu_custom_call.1} parent=1 // loop_footer_branch
      %15 = sbr.rel target = $region3
    $region8: #{tpu_custom_call.1} parent=1 // loop_exit
      _
    %704 = vsyncpa [#allocation3], 1
    %s705 = scalar_lea.sflag [#allocation3], 1
    %706 = vsyncpa %s705, 1
    %707 = vsyncpa [#allocation6], 1
    %708 = vsyncpa [#allocation4], 1
    %s709 = scalar_lea.sflag [#allocation4], 1
    %710 = vsyncpa %s709, 1

</llo_original>
